<compile_context>
chip_gen: v7x
topology: tpu7x:2x2x1
jax: 0.10.0
libtpu: 0.0.40
codegen_flags: <defaults>
</compile_context>

<pallas_src>
import jax
import jax.numpy as jnp
from jax.experimental import pallas as pl
from jax.experimental.pallas import tpu as pltpu


def _round_up(n, m):
    return ((n + m - 1) // m) * m


def _vmem_capacity_bytes():
    """Physical VMEM of the attached TPU (conservative fallback: v7x 64 MiB)."""
    try:
        info = pltpu.get_tpu_info()
        cap = int(getattr(info, "vmem_capacity_bytes"))
        if cap > 0:
            return cap
    except Exception:
        pass
    return 64 * 1024 * 1024


def _make_corr2d_kernel(kh, kw, tm, halo, w_pad):
    """Build a Pallas kernel for fixed (static) kernel / tile sizes."""
    top = tm - halo          # output rows computed straight from x_ref
    assert top >= 0 and halo >= kh - 1

    def corr2d_kernel(w_ref, b_ref, x_ref, xh_ref, o_ref, scr_ref):
        # w_ref  : (KH*KW,)        SMEM (flattened weight taps)
        # b_ref  : (1,)            SMEM
        # x_ref  : (TM, W_PAD)     current row tile of the input (VMEM)
        # xh_ref : (HALO, W_PAD)   halo rows just below the tile (VMEM)
        # o_ref  : (TM, W_PAD)     lane-dense output tile (VMEM)
        # scr_ref: (2*HALO, W_PAD) VMEM scratch holding only the boundary rows

        # Stage the 2*HALO boundary rows contiguously so bands that straddle
        # the tile boundary are plain sublane-offset loads (no concat copy).
        scr_ref[:halo, :] = x_ref[top:tm, :]
        scr_ref[halo:, :] = xh_ref[...]

        # Hoist all scalar (SMEM) reads; fold the bias into the accumulator.
        taps = [w_ref[t] for t in range(kh * kw)]
        bias = b_ref[0]

        def accumulate(src_ref, nrows):
            acc = jnp.full((nrows, w_pad), bias, dtype=jnp.float32)
            for di in range(kh):
                band = src_ref[di:di + nrows, :]
                for dj in range(kw):
                    if dj == 0:
                        shifted = band
                    else:
                        # Left-shift by dj columns via an XLU rotate; the
                        # circular wrap only lands in discarded columns.
                        shifted = pltpu.roll(band, shift=w_pad - dj, axis=1)
                    acc = acc + taps[di * kw + dj] * shifted
            return acc

        if top > 0:
            # Rows whose full kh-window lives inside x_ref.
            o_ref[:top, :] = accumulate(x_ref, top)
        # Boundary rows read from the staged scratch (x tail rows + halo).
        o_ref[top:, :] = accumulate(scr_ref, halo)

    return corr2d_kernel


def conv2d_forward(x, weight, bias):
    """Pallas equivalent of Conv2D.forward: corr2d(x, weight) + bias (f32)."""
    h, w = x.shape
    kh, kw = weight.shape
    oh, ow = h - kh + 1, w - kw + 1
    assert oh >= 1 and ow >= 1, "kernel larger than input"

    # Lane-dense width (multiple of 128) and row-halo band (multiple of 8).
    w_pad = max(128, _round_up(w, 128))
    halo = max(8, _round_up(kh - 1, 8))
    assert w_pad % 128 == 0 and w_pad >= w          # roll wrap stays in pad cols

    # ---- wrapper-side HBM traffic: pad/cast only when unavoidable ----------
    needs_copy = (x.dtype != jnp.float32) or (w_pad != w) or (h < halo)
    if needs_copy:
        h_rows = max(h, halo)
        x_in = jnp.zeros((h_rows, w_pad), jnp.float32).at[:h, :w].set(
            x.astype(jnp.float32))
    else:
        h_rows = h
        x_in = x                                     # zero-copy pass-through

    # ---- generation-aware tile sizing --------------------------------------
    vmem_cap = _vmem_capacity_bytes()                # 128 MiB v5e/v6e, 64 MiB v7x
    vmem_limit = int(vmem_cap * 0.75)                # ~96 MiB / ~48 MiB
    block_budget = vmem_cap // 2                     # blocks + scratch headroom
    per_row_bytes = w_pad * 4

    # ~6 tile-rows of f32 live at once: 2x(in) + 2x(out) double buffers,
    # accumulator value, small halo/scratch/band slack.
    tm_cap = max(halo, (block_budget // (6 * per_row_bytes)) // halo * halo)
    tm_target = _round_up(max(512, (4 << 20) // per_row_bytes), halo)  # ~4 MiB blk
    tm_rows_cap = max(halo, (h_rows // halo) * halo)  # keep blocks within array
    tm = max(halo, min(_round_up(oh, halo), tm_target, tm_cap, tm_rows_cap))
    assert tm % halo == 0 and tm >= halo

    out_rows = _round_up(oh, halo)                   # minimal lane/sublane-dense out
    n_tiles = pl.cdiv(out_rows, tm)
    blocks_per_tile = tm // halo
    max_halo_blk = (h_rows - 1) // halo              # clamp: last tile needs no halo

    w_flat = weight.astype(jnp.float32).reshape(-1)  # 1-D SMEM (avoids 8x128 pad)
    b_vec = bias.astype(jnp.float32).reshape(-1)[:1]

    kernel = _make_corr2d_kernel(kh, kw, tm, halo, w_pad)

    out_padded = pl.pallas_call(
        kernel,
        out_shape=jax.ShapeDtypeStruct((out_rows, w_pad), jnp.float32),
        grid=(n_tiles,),
        in_specs=[
            # weight / bias: whole arrays in SMEM, read as scalars.
            pl.BlockSpec(memory_space=pltpu.MemorySpace.SMEM),
            pl.BlockSpec(memory_space=pltpu.MemorySpace.SMEM),
            # current output-row tile of the input (partial edge blocks OK).
            pl.BlockSpec((tm, w_pad), lambda i: (i, 0)),
            # halo rows immediately below the tile; clamped so the block is
            # always at least partially in-bounds (contents only matter when
            # the unclamped index is in range, which the clamp never changes).
            pl.BlockSpec(
                (halo, w_pad),
                lambda i: (jnp.minimum((i + 1) * blocks_per_tile, max_halo_blk), 0)),
        ],
        out_specs=pl.BlockSpec((tm, w_pad), lambda i: (i, 0)),
        scratch_shapes=[pltpu.VMEM((2 * halo, w_pad), jnp.float32)],
        compiler_params=pltpu.CompilerParams(
            dimension_semantics=("parallel",),
            vmem_limit_bytes=vmem_limit),
    )(w_flat, b_vec, x_in, x_in)

    if out_rows == oh and w_pad == ow:
        return out_padded
    return out_padded[:oh, :ow]


def _reference_corr2d(x, k, b):
    """Pure-JAX reference mirroring the PyTorch corr2d loop."""
    kh, kw = k.shape
    oh, ow = x.shape[0] - kh + 1, x.shape[1] - kw + 1
    acc = jnp.full((oh, ow), b[0], jnp.float32)
    for di in range(kh):
        for dj in range(kw):
            acc = acc + k[di, dj] * x[di:di + oh, dj:dj + ow].astype(jnp.float32)
    return acc


if __name__ == "__main__":
    key = jax.random.PRNGKey(0)
    kx, kw_, kb = jax.random.split(key, 3)

    H, W = 16, 16
    KH, KW = 2, 2

    # Deterministic "parameters" (the module's __init__ uses torch.randn).
    x = jax.random.normal(kx, (H, W), dtype=jnp.float32)
    weight = jax.random.normal(kw_, (KH, KW), dtype=jnp.float32)
    bias = jax.random.normal(kb, (1,), dtype=jnp.float32)

    out = jax.block_until_ready(conv2d_forward(x, weight, bias))
    ref = _reference_corr2d(x, weight, bias)
    assert out.shape == (H - KH + 1, W - KW + 1)
    assert jnp.allclose(out, ref, atol=1e-5, rtol=1e-5)

    # Also check the exact example from the original module spec.
    X = jnp.arange(9, dtype=jnp.float32).reshape(3, 3)
    K = jnp.array([[0.0, 1.0], [2.0, 3.0]], dtype=jnp.float32)
    B0 = jnp.zeros((1,), dtype=jnp.float32)
    out2 = jax.block_until_ready(conv2d_forward(X, K, B0))
    assert jnp.allclose(out2, jnp.array([[19.0, 25.0], [37.0, 43.0]]))

    # Larger, non-multiple-of-8 shape to exercise partial edge blocks + clamp.
    x3 = jax.random.normal(jax.random.PRNGKey(1), (67, 200), dtype=jnp.float32)
    w3 = jax.random.normal(jax.random.PRNGKey(2), (3, 3), dtype=jnp.float32)
    b3 = jax.random.normal(jax.random.PRNGKey(3), (1,), dtype=jnp.float32)
    out3 = jax.block_until_ready(conv2d_forward(x3, w3, b3))
    ref3 = _reference_corr2d(x3, w3, b3)
    assert out3.shape == ref3.shape
    assert jnp.allclose(out3, ref3, atol=1e-4, rtol=1e-4)

    print("KERNEL_OK")
</pallas_src>

<mosaic_0001>
module attributes {stable_mosaic.version = 11 : i64} {
  func.func @corr2d_kernel(%arg0: i32, %arg1: memref<4xf32, #tpu.memory_space<smem>>, %arg2: memref<1xf32, #tpu.memory_space<smem>>, %arg3: memref<16x128xf32, #tpu.memory_space<vmem>>, %arg4: memref<8x128xf32, #tpu.memory_space<vmem>>, %arg5: memref<16x128xf32, #tpu.memory_space<vmem>>, %arg6: memref<16x128xf32, #tpu.memory_space<vmem>>) attributes {dimension_semantics = [#tpu.dimension_semantics<parallel>], iteration_bounds = array<i64: 1>, scalar_prefetch = 0 : i64, scratch_operands = 1 : i64, tpu.core_type = #tpu.core_type<tc>, window_params = [{transform_indices = @transform_0, window_bounds = array<i64: 4>}, {transform_indices = @transform_1, window_bounds = array<i64: 1>}, {transform_indices = @transform_2, window_bounds = array<i64: 16, 128>}, {transform_indices = @transform_3, window_bounds = array<i64: 8, 128>}, {transform_indices = @transform_4, window_bounds = array<i64: 16, 128>}]} {
    %c8 = arith.constant 8 : index
    %c0 = arith.constant 0 : index
    %0 = vector.load %arg3[%c8, %c0] : memref<16x128xf32, #tpu.memory_space<vmem>>, vector<8x128xf32>
    %c0_0 = arith.constant 0 : index
    %c0_1 = arith.constant 0 : index
    %1 = vector.load %arg6[%c0_0, %c0_1] : memref<16x128xf32, #tpu.memory_space<vmem>>, vector<8x128xf32>
    tpu.vector_store %arg6[%c0_0, %c0_1], %0 {strides = array<i32>} : memref<16x128xf32, #tpu.memory_space<vmem>>, vector<8x128xf32>,
    %c0_2 = arith.constant 0 : index
    %c0_3 = arith.constant 0 : index
    %2 = vector.load %arg4[%c0_2, %c0_3] : memref<8x128xf32, #tpu.memory_space<vmem>>, vector<8x128xf32>
    %c8_4 = arith.constant 8 : index
    %c0_5 = arith.constant 0 : index
    %3 = vector.load %arg6[%c8_4, %c0_5] : memref<16x128xf32, #tpu.memory_space<vmem>>, vector<8x128xf32>
    tpu.vector_store %arg6[%c8_4, %c0_5], %2 {strides = array<i32>} : memref<16x128xf32, #tpu.memory_space<vmem>>, vector<8x128xf32>,
    %c0_6 = arith.constant 0 : index
    %4 = memref.load %arg1[%c0_6] : memref<4xf32, #tpu.memory_space<smem>>
    %c1 = arith.constant 1 : index
    %5 = memref.load %arg1[%c1] : memref<4xf32, #tpu.memory_space<smem>>
    %c2 = arith.constant 2 : index
    %6 = memref.load %arg1[%c2] : memref<4xf32, #tpu.memory_space<smem>>
    %c3 = arith.constant 3 : index
    %7 = memref.load %arg1[%c3] : memref<4xf32, #tpu.memory_space<smem>>
    %c0_7 = arith.constant 0 : index
    %8 = memref.load %arg2[%c0_7] : memref<1xf32, #tpu.memory_space<smem>>
    %9 = vector.broadcast %8 : f32 to vector<8x128xf32>
    %c0_8 = arith.constant 0 : index
    %c0_9 = arith.constant 0 : index
    %10 = vector.load %arg3[%c0_8, %c0_9] : memref<16x128xf32, #tpu.memory_space<vmem>>, vector<8x128xf32>
    %11 = vector.broadcast %4 : f32 to vector<8x128xf32>
    %12 = arith.mulf %11, %10 : vector<8x128xf32>
    %13 = arith.addf %9, %12 : vector<8x128xf32>
    %c127_i32 = arith.constant 127 : i32
    %14 = tpu.dynamic_rotate %10 by %c127_i32 dim 1 : vector<8x128xf32>, i32 -> vector<8x128xf32>
    %15 = vector.broadcast %5 : f32 to vector<8x128xf32>
    %16 = arith.mulf %15, %14 : vector<8x128xf32>
    %17 = arith.addf %13, %16 : vector<8x128xf32>
    %c1_10 = arith.constant 1 : index
    %c0_11 = arith.constant 0 : index
    %18 = vector.load %arg3[%c1_10, %c0_11] : memref<16x128xf32, #tpu.memory_space<vmem>>, vector<8x128xf32>
    %19 = vector.broadcast %6 : f32 to vector<8x128xf32>
    %20 = arith.mulf %19, %18 : vector<8x128xf32>
    %21 = arith.addf %17, %20 : vector<8x128xf32>
    %c127_i32_12 = arith.constant 127 : i32
    %22 = tpu.dynamic_rotate %18 by %c127_i32_12 dim 1 : vector<8x128xf32>, i32 -> vector<8x128xf32>
    %23 = vector.broadcast %7 : f32 to vector<8x128xf32>
    %24 = arith.mulf %23, %22 : vector<8x128xf32>
    %25 = arith.addf %21, %24 : vector<8x128xf32>
    %c0_13 = arith.constant 0 : index
    %c0_14 = arith.constant 0 : index
    %26 = vector.load %arg5[%c0_13, %c0_14] : memref<16x128xf32, #tpu.memory_space<vmem>>, vector<8x128xf32>
    tpu.vector_store %arg5[%c0_13, %c0_14], %25 {strides = array<i32>} : memref<16x128xf32, #tpu.memory_space<vmem>>, vector<8x128xf32>,
    %27 = vector.broadcast %8 : f32 to vector<8x128xf32>
    %c0_15 = arith.constant 0 : index
    %c0_16 = arith.constant 0 : index
    %28 = vector.load %arg6[%c0_15, %c0_16] : memref<16x128xf32, #tpu.memory_space<vmem>>, vector<8x128xf32>
    %29 = vector.broadcast %4 : f32 to vector<8x128xf32>
    %30 = arith.mulf %29, %28 : vector<8x128xf32>
    %31 = arith.addf %27, %30 : vector<8x128xf32>
    %c127_i32_17 = arith.constant 127 : i32
    %32 = tpu.dynamic_rotate %28 by %c127_i32_17 dim 1 : vector<8x128xf32>, i32 -> vector<8x128xf32>
    %33 = vector.broadcast %5 : f32 to vector<8x128xf32>
    %34 = arith.mulf %33, %32 : vector<8x128xf32>
    %35 = arith.addf %31, %34 : vector<8x128xf32>
    %c1_18 = arith.constant 1 : index
    %c0_19 = arith.constant 0 : index
    %36 = vector.load %arg6[%c1_18, %c0_19] : memref<16x128xf32, #tpu.memory_space<vmem>>, vector<8x128xf32>
    %37 = vector.broadcast %6 : f32 to vector<8x128xf32>
    %38 = arith.mulf %37, %36 : vector<8x128xf32>
    %39 = arith.addf %35, %38 : vector<8x128xf32>
    %c127_i32_20 = arith.constant 127 : i32
    %40 = tpu.dynamic_rotate %36 by %c127_i32_20 dim 1 : vector<8x128xf32>, i32 -> vector<8x128xf32>
    %41 = vector.broadcast %7 : f32 to vector<8x128xf32>
    %42 = arith.mulf %41, %40 : vector<8x128xf32>
    %43 = arith.addf %39, %42 : vector<8x128xf32>
    %c8_21 = arith.constant 8 : index
    %c0_22 = arith.constant 0 : index
    %44 = vector.load %arg5[%c8_21, %c0_22] : memref<16x128xf32, #tpu.memory_space<vmem>>, vector<8x128xf32>
    tpu.vector_store %arg5[%c8_21, %c0_22], %43 {strides = array<i32>} : memref<16x128xf32, #tpu.memory_space<vmem>>, vector<8x128xf32>,
    return
  }
  func.func @transform_0(%arg0: i32) -> i32 {
    %c0_i32 = arith.constant 0 : i32
    %c0_i32_0 = arith.constant 0 : i32
    return %c0_i32 : i32
  }
  func.func @transform_1(%arg0: i32) -> i32 {
    %c0_i32 = arith.constant 0 : i32
    %c0_i32_0 = arith.constant 0 : i32
    return %c0_i32 : i32
  }
  func.func @transform_2(%arg0: i32) -> (i32, i32) {
    %c0_i32 = arith.constant 0 : i32
    %c0_i32_0 = arith.constant 0 : i32
    return %arg0, %c0_i32 : i32, i32
  }
  func.func @transform_3(%arg0: i32) -> (i32, i32) {
    %c1_i32 = arith.constant 1 : i32
    %0 = arith.addi %arg0, %c1_i32 : i32
    %c2_i32 = arith.constant 2 : i32
    %1 = arith.muli %0, %c2_i32 : i32
    %c1_i32_0 = arith.constant 1 : i32
    %2 = arith.minsi %1, %c1_i32_0 : i32
    %c0_i32 = arith.constant 0 : i32
    %c0_i32_1 = arith.constant 0 : i32
    return %2, %c0_i32 : i32, i32
  }
  func.func @transform_4(%arg0: i32) -> (i32, i32) {
    %c0_i32 = arith.constant 0 : i32
    %c0_i32_0 = arith.constant 0 : i32
    return %arg0, %c0_i32 : i32, i32
  }
}

</mosaic_0001>

<llo_original>
// kernel: tpu_custom_call.1
$region0: #{tpu_custom_call.1}
  #allocation0 [shape = 'u32[]', space=smem, size = 0x4, offset = 0x4, fixed_abs, tag = 'smem constant byte address 0x4 - core index']
  #allocation1 [shape = 'u32[144,128]{1,0:T(1,128)}', space=vmem, size = 0x12000, scoped, tag = 'internal scratch']
  #allocation2 [shape = 'f32[16,128]{1,0:T(8,128)}', space=vmem, size = 0x2000, scoped, tag = 'scratch operand']
  #allocation3 [shape = 'f32[1]{0:T(128)S(6)}', space=smem, size = 0x200, scoped, tag = 'scoped memory for tpu_custom_call.1']
  %s0 = inlined_call_operand.vmem [shape: f32[4], index: 0, kind: input, shape index: {}]
  %s1 = inlined_call_operand.<no memory space> [shape: f32[1], index: 1, kind: input, shape index: {}]
  %s2 = inlined_call_operand.hbm [shape: f32[16,128], index: 2, kind: input, shape index: {}]
  %s3 = inlined_call_operand.hbm [shape: f32[16,128], index: 3, kind: input, shape index: {}]
  %s4 = inlined_call_operand.hbm [shape: f32[16,128], index: 4, kind: output, shape index: {}]
  %s5 = sld [smem:[#allocation0]]
  $region38: #{tpu_custom_call.1} parent=0
    _
  %s7 = ssub.s32 1, %s5
  %s8 = scalar_select 0, %s7, %s5
  %9 = sst [smem:[#allocation3]] %s1
  $region1: #{tpu_custom_call.1} parent=0
    #allocation4 [shape = 'u8[512]{0}', space=smem, size = 0x200, scoped, tag = 'input window, operand 0, single buffered']
    #allocation5 [shape = 's32[1]{0}', space=sflag, size = 0x4, scoped, tag = 'scoped memory for tpu_custom_call.1']
    #allocation6 [shape = 's32[1]{0}', space=sflag, size = 0x4, scoped, tag = 'scoped memory for tpu_custom_call.1']
    #allocation7 [shape = 's32[1]{0}', space=sflag, size = 0x4, scoped, tag = 'scoped memory for tpu_custom_call.1']
    #allocation8 [shape = 'u8[8192]{0}', space=vmem, size = 0x2000, scoped, tag = 'input window, operand 2, single buffered']
    #allocation9 [shape = 'u8[4096]{0}', space=vmem, size = 0x1000, scoped, tag = 'input window, operand 3, single buffered']
    #allocation10 [shape = 's32[1]{0}', space=sflag, size = 0x4, scoped, tag = 'scoped memory for tpu_custom_call.1']
    #allocation11 [shape = 'u8[8192]{0}', space=vmem, size = 0x2000, scoped, tag = 'output window, operand 0, single buffered']
    %10 = vsyncpa [#allocation7], 0
    %11 = vsyncpa [#allocation5], 0
    %12 = vsyncpa [#allocation10], 0
    %13 = vsyncpa [#allocation6], 0
    // Predicated region
    $region2: #{tpu_custom_call.1} parent=1 // pred_check
      _
    $region3: #{tpu_custom_call.1} parent=1 // pred_check_branch
      %15 = sbr.rel (0) target = $region5
    $region4: #{tpu_custom_call.1} parent=1 // pred_region
      %s17 = ssub.s32 16, 16
      %18 = vsyncadd [#allocation7], %s17
      %s20 = sshll.u32 %s0, 4
      %s21 = int_to_ptr.vmem [resolvable:$true] %s20
      %23 = dma.vmem_to_smem %s21, 16, [#allocation4], [#allocation7]
    $region5: #{tpu_custom_call.1} parent=1 // pred_fallthru
      _
    // Predicated region
    $region6: #{tpu_custom_call.1} parent=1 // pred_check
      _
    $region7: #{tpu_custom_call.1} parent=1 // pred_check_branch
      %25 = sbr.rel (0) target = $region9
    $region8: #{tpu_custom_call.1} parent=1 // pred_region
      _
    $region9: #{tpu_custom_call.1} parent=1 // pred_fallthru
      _
    // Predicated region
    $region10: #{tpu_custom_call.1} parent=1 // pred_check
      _
    $region11: #{tpu_custom_call.1} parent=1 // pred_check_branch
      %27 = sbr.rel (0) target = $region13
    $region12: #{tpu_custom_call.1} parent=1 // pred_region
      %s29 = ssub.s32 256, 256
      %30 = vsyncadd [#allocation5], %s29
      %s31 = sshll.u32 [#allocation8], 4
      %s32 = int_to_ptr.vmem [resolvable:$true] %s31
      %37 = dma.hbm_to_vmem [thread:$0]  %s2, 256, %s32, [#allocation5], 128, 128, 8
    $region13: #{tpu_custom_call.1} parent=1 // pred_fallthru
      _
    // Predicated region
    $region14: #{tpu_custom_call.1} parent=1 // pred_check
      _
    $region15: #{tpu_custom_call.1} parent=1 // pred_check_branch
      %39 = sbr.rel (0) target = $region17
    $region16: #{tpu_custom_call.1} parent=1 // pred_region
      %s40 = sadd.s32 0, 1
      %s41 = smul.u32 %s40, 2
      %p42 = scmp.lt.s32.totalorder %s41, 1
      %s43 = scalar_select %p42, %s41, 1
      %s45 = ssub.s32 128, 128
      %46 = vsyncadd [#allocation10], %s45
      %s47 = smul.addr %s43, 128
      %s48 = scalar_lea.hbm %s3, %s47
      %s50 = sshll.u32 [#allocation9], 4
      %s51 = int_to_ptr.vmem [resolvable:$true] %s50
      %53 = dma.hbm_to_vmem [thread:$0]  %s48, 128, %s51, [#allocation10]
    $region17: #{tpu_custom_call.1} parent=1 // pred_fallthru
      _
    // Predicated region
    $region18: #{tpu_custom_call.1} parent=1 // pred_check
      _
    $region19: #{tpu_custom_call.1} parent=1 // pred_check_branch
      %55 = sbr.rel (0) target = $region21
    $region20: #{tpu_custom_call.1} parent=1 // pred_region
      %56 = dma.done [#allocation7], 16
    $region21: #{tpu_custom_call.1} parent=1 // pred_fallthru
      _
    // Predicated region
    $region22: #{tpu_custom_call.1} parent=1 // pred_check
      _
    $region23: #{tpu_custom_call.1} parent=1 // pred_check_branch
      %58 = sbr.rel (0) target = $region25
    $region24: #{tpu_custom_call.1} parent=1 // pred_region
      %59 = dma.done [#allocation5], 256
    $region25: #{tpu_custom_call.1} parent=1 // pred_fallthru
      _
    // Predicated region
    $region26: #{tpu_custom_call.1} parent=1 // pred_check
      _
    $region27: #{tpu_custom_call.1} parent=1 // pred_check_branch
      %61 = sbr.rel (0) target = $region29
    $region28: #{tpu_custom_call.1} parent=1 // pred_region
      %62 = dma.done [#allocation10], 128
    $region29: #{tpu_custom_call.1} parent=1 // pred_fallthru
      _
    %63 = sfence
    %s64 = sadd.s32 0, 1
    %s65 = smul.u32 %s64, 2
    %p66 = scmp.lt.s32.totalorder %s65, 1
    %s67 = scalar_select %p66, %s65, 1
    %v68 = vld [vmem:[#allocation8 + $0x8] sm:$0xff]
    %69 = vst [vmem:[#allocation2] sm:$0xff] %v68
    %v70 = vld [vmem:[#allocation9] sm:$0xff]
    %71 = vst [vmem:[#allocation2 + $0x8] sm:$0xff] %v70
    %s72 = sld [smem:[#allocation4]]
    %s73 = sld [smem:[#allocation4 + $0x1]]
    %s74 = sld [smem:[#allocation4 + $0x2]]
    %s75 = sld [smem:[#allocation4 + $0x3]]
    %s76 = sld [smem:[#allocation3]]
    %v77 = vstv %s76
    %v78 = vld [vmem:[#allocation8] sm:$0xff]
    %v79 = vstv %s72
    %v80 = vmul.f32 %v79, %v78
    %v81 = vadd.f32 %v77, %v80
    %82 = vrot.lane.b32.xlu0 %v78, 127
    %v83 = vpop.permute.xlu0 %82
    %v84 = vstv %s73
    %v85 = vmul.f32 %v84, %v83
    %v86 = vadd.f32 %v81, %v85
    %v87 = vld [vmem:[#allocation8 + $0x1] sm:$0xff]
    %v88 = vstv %s74
    %v89 = vmul.f32 %v88, %v87
    %v90 = vadd.f32 %v86, %v89
    %91 = vrot.lane.b32.xlu0 %v87, 127
    %v92 = vpop.permute.xlu0 %91
    %v93 = vstv %s75
    %v94 = vmul.f32 %v93, %v92
    %v95 = vadd.f32 %v90, %v94
    %96 = vst [vmem:[#allocation11] sm:$0xff] %v95
    %v97 = vld [vmem:[#allocation2] sm:$0xff]
    %v98 = vmul.f32 %v79, %v97
    %v99 = vadd.f32 %v77, %v98
    %100 = vrot.lane.b32.xlu0 %v97, 127
    %v101 = vpop.permute.xlu0 %100
    %v102 = vmul.f32 %v84, %v101
    %v103 = vadd.f32 %v99, %v102
    %v104 = vld [vmem:[#allocation2 + $0x1] sm:$0xff]
    %v105 = vmul.f32 %v88, %v104
    %v106 = vadd.f32 %v103, %v105
    %107 = vrot.lane.b32.xlu0 %v104, 127
    %v108 = vpop.permute.xlu0 %107
    %v109 = vmul.f32 %v93, %v108
    %v110 = vadd.f32 %v106, %v109
    %111 = vst [vmem:[#allocation11 + $0x8] sm:$0xff] %v110
    // Predicated region
    $region30: #{tpu_custom_call.1} parent=1 // pred_check
      _
    $region31: #{tpu_custom_call.1} parent=1 // pred_check_branch
      %113 = sbr.rel (0) target = $region33
    $region32: #{tpu_custom_call.1} parent=1 // pred_region
      %s115 = ssub.s32 256, 256
      %116 = vsyncadd [#allocation6], %s115
      %s117 = sshll.u32 [#allocation11], 4
      %s118 = int_to_ptr.vmem [resolvable:$true] %s117
      %123 = dma.vmem_to_hbm [thread:$0]  %s118, 256, %s4, [#allocation6], 128, 128, 8
    $region33: #{tpu_custom_call.1} parent=1 // pred_fallthru
      _
    // Predicated region
    $region34: #{tpu_custom_call.1} parent=1 // pred_check
      _
    $region35: #{tpu_custom_call.1} parent=1 // pred_check_branch
      %125 = sbr.rel (0) target = $region37
    $region36: #{tpu_custom_call.1} parent=1 // pred_region
      %126 = dma.done [#allocation6], 256
    $region37: #{tpu_custom_call.1} parent=1 // pred_fallthru
      _
    %127 = vsyncpa [#allocation5], 1
    %128 = vsyncpa [#allocation10], 1
    %129 = vsyncpa [#allocation6], 1
    %130 = vsyncpa [#allocation7], 1

</llo_original>
